<compile_context>
chip_gen: v6e
topology: v6e:2x2x1
jax: 0.10.0
libtpu: 0.0.40
codegen_flags: <defaults>
</compile_context>

<pallas_src>
import functools

import jax
import jax.numpy as jnp
from jax.experimental import pallas as pl
from jax.experimental.pallas import tpu as pltpu


# ----------------------------- small helpers ------------------------------ #

def _round_up(n, m):
    return (n + m - 1) // m * m


def _pad_feature(dim):
    """Lane padding for a feature dim. 128 for small dims; bump to 256-lane
    multiples for larger dims (fills v6e/v7x's 256x256 MXU) only when the
    extra zero padding is <= 25% over the 128-padded size."""
    p128 = _round_up(dim, 128)
    p256 = _round_up(dim, 256)
    if dim >= 256 and p256 * 4 <= p128 * 5:
        return p256
    return p128


def _pick_tile(dim):
    """Largest of {1024,512,256,128} that divides a (already 128-padded) dim."""
    for t in (1024, 512, 256, 128):
        if dim >= t and dim % t == 0:
            return t
    return dim


_VMEM_BUDGET = None


def _vmem_budget():
    """~85% of the physical per-core VMEM (chip-derived; 64 MiB fallback)."""
    global _VMEM_BUDGET
    if _VMEM_BUDGET is None:
        try:
            cap = int(pltpu.get_tpu_info().vmem_capacity_bytes)
        except Exception:
            cap = 64 << 20          # conservative (v7x per-TC)
        if cap <= 0:
            cap = 64 << 20
        _VMEM_BUDGET = cap * 85 // 100
    return _VMEM_BUDGET


@functools.lru_cache(maxsize=1)
def _single_buffer_supported():
    """One-time probe: does this Pallas accept pl.Buffered(1) on an input?
    (Call once outside jit if you plan to jit the forward wrapper.)"""
    def k(a_ref, o_ref):
        o_ref[...] = a_ref[...] + 1.0
    try:
        a = jnp.zeros((8, 128), jnp.float32)
        out = pl.pallas_call(
            k,
            out_shape=jax.ShapeDtypeStruct((16, 128), jnp.float32),
            grid=(2,),
            in_specs=[pl.BlockSpec((8, 128), lambda i: (0, 0),
                                   pipeline_mode=pl.Buffered(1))],
            out_specs=pl.BlockSpec((8, 128), lambda i: (i, 0)),
        )(a)
        jax.block_until_ready(out)
        return True
    except Exception:
        return False


# ------------------------------ kernels ------------------------------------ #

def _fused_mlp_kernel(n_layers, relu_flags, *refs):
    """Fused MLP: all Linear (+ReLU) layers computed on one batch tile.
    bf16 MXU operands, f32 accumulation, bf16 inter-layer activations."""
    x_ref = refs[0]
    o_ref = refs[-1]
    params = refs[1:-1]                 # interleaved: w0, b0, w1, b1, ...
    h = x_ref[...]                      # bf16 (block_m, in_pad)
    for i in range(n_layers):
        w = params[2 * i][...]          # bf16 (K_pad, N_pad)
        b = params[2 * i + 1][...]      # f32  (1, N_pad)
        acc = jnp.dot(h, w, preferred_element_type=jnp.float32) + b
        if relu_flags[i]:
            acc = jnp.maximum(acc, 0.0)
        # Carry bf16 between layers: halves spill/reload traffic between dots.
        h = acc.astype(jnp.bfloat16) if i + 1 < n_layers else acc
    o_ref[...] = h.astype(o_ref.dtype)


def _linear_kernel(relu, a_ref, w_ref, b_ref, o_ref, acc_ref):
    """Single Linear(+ReLU) layer with K-reduction grid axis (K/N tiled)."""
    @pl.when(pl.program_id(2) == 0)
    def _():
        acc_ref[...] = jnp.zeros_like(acc_ref)
    acc_ref[...] += jnp.dot(a_ref[...], w_ref[...],
                            preferred_element_type=jnp.float32)
    @pl.when(pl.program_id(2) == pl.num_programs(2) - 1)
    def _():
        r = acc_ref[...] + b_ref[...]
        if relu:
            r = jnp.maximum(r, 0.0)
        o_ref[...] = r.astype(o_ref.dtype)


# ----------------------------- host wrappers -------------------------------- #

def prepare_params(weights, biases):
    """Pad feature dims (zero padding is exact: padded bias lanes are 0 and
    ReLU(0)=0 so padded lanes stay 0 through the net) and cast weights to bf16.
    Call ONCE and reuse across forwards (hoists pad/cast off the hot path)."""
    in_dim = int(weights[0].shape[0])
    in_pad = _pad_feature(in_dim)
    w_pad, b_pad, dims_pad = [], [], []
    prev = in_pad
    for w, b in zip(weights, biases):
        fi, fo = int(w.shape[0]), int(w.shape[1])
        fo_p = _pad_feature(fo)
        wp = (jnp.zeros((prev, fo_p), jnp.float32)
              .at[:fi, :fo].set(w).astype(jnp.bfloat16))
        bp = jnp.zeros((1, fo_p), jnp.float32).at[:, :fo].set(b.reshape(1, -1))
        w_pad.append(wp)
        b_pad.append(bp)
        dims_pad.append((prev, fo_p))
        prev = fo_p
    return {
        "w": tuple(w_pad), "b": tuple(b_pad),
        "in_dim": in_dim, "in_pad": in_pad,
        "out_dim": int(weights[-1].shape[1]), "out_pad": prev,
        "dims_pad": tuple(dims_pad),
    }


def _fused_forward(x_p, prepared, relu_flags, *, block_m, single_buf,
                   vmem_budget, out_dtype):
    Bp, in_pad = x_p.shape
    dims_pad = prepared["dims_pad"]
    out_pad = prepared["out_pad"]
    n_layers = len(prepared["w"])

    kernel = functools.partial(_fused_mlp_kernel, n_layers, relu_flags)

    in_specs = [pl.BlockSpec((block_m, in_pad), lambda i: (i, 0))]
    flat_params = []
    for w, b in zip(prepared["w"], prepared["b"]):
        flat_params += [w, b]
        if single_buf:
            # Grid-invariant blocks: one VMEM buffer is enough.
            in_specs.append(pl.BlockSpec(w.shape, lambda i: (0, 0),
                                         pipeline_mode=pl.Buffered(1)))
            in_specs.append(pl.BlockSpec(b.shape, lambda i: (0, 0),
                                         pipeline_mode=pl.Buffered(1)))
        else:
            in_specs.append(pl.BlockSpec(w.shape, lambda i: (0, 0)))
            in_specs.append(pl.BlockSpec(b.shape, lambda i: (0, 0)))

    w_bytes = sum(int(w.size) * 2 for w in prepared["w"])
    b_bytes = sum(int(b.size) * 4 for b in prepared["b"])
    nbuf_w = 1 if single_buf else 2
    max_feat = max([in_pad] + [n for _, n in dims_pad])
    needed = (2 * block_m * in_pad * 2          # double-buffered bf16 x tile
              + 2 * block_m * out_pad * 4       # double-buffered f32 out tile
              + nbuf_w * (w_bytes + b_bytes)    # resident weights/biases
              + block_m * max_feat * 6)         # f32 acc + bf16 h activations
    vmem_limit = int(min(max(needed * 5 // 4, 32 << 20), vmem_budget))

    flops = 2 * Bp * sum(k * n for k, n in dims_pad)
    bytes_accessed = int(Bp * in_pad * 2 + w_bytes + b_bytes + Bp * out_pad * 4)
    cost = pl.CostEstimate(flops=int(flops), transcendentals=0,
                           bytes_accessed=bytes_accessed)

    return pl.pallas_call(
        kernel,
        out_shape=jax.ShapeDtypeStruct((Bp, out_pad), out_dtype),
        grid=(Bp // block_m,),
        in_specs=in_specs,
        out_specs=pl.BlockSpec((block_m, out_pad), lambda i: (i, 0)),
        compiler_params=pltpu.CompilerParams(
            dimension_semantics=("parallel",),
            vmem_limit_bytes=vmem_limit),
        cost_estimate=cost,
    )(x_p, *flat_params)


def _layer_tiled(a, w, b, relu, *, block_m, out_dtype, vmem_budget):
    """One Linear(+ReLU) as a (M,N,K)-tiled pallas_call (weights not resident)."""
    Bp, Kp = a.shape
    _, Np = w.shape
    bk = _pick_tile(Kp)
    bn = _pick_tile(Np)
    out_itemsize = jnp.dtype(out_dtype).itemsize

    needed = (2 * (block_m * bk * 2 + bk * bn * 2 + bn * 4
                   + block_m * bn * out_itemsize)
              + block_m * bn * 4)
    vmem_limit = int(min(max(needed * 3 // 2, 32 << 20), vmem_budget))
    cost = pl.CostEstimate(
        flops=int(2 * Bp * Kp * Np), transcendentals=0,
        bytes_accessed=int(Bp * Kp * 2 + Kp * Np * 2 + Np * 4
                           + Bp * Np * out_itemsize))

    return pl.pallas_call(
        functools.partial(_linear_kernel, bool(relu)),
        out_shape=jax.ShapeDtypeStruct((Bp, Np), out_dtype),
        grid=(Bp // block_m, Np // bn, Kp // bk),
        in_specs=[pl.BlockSpec((block_m, bk), lambda i, j, k: (i, k)),
                  pl.BlockSpec((bk, bn), lambda i, j, k: (k, j)),
                  pl.BlockSpec((1, bn), lambda i, j, k: (0, j))],
        out_specs=pl.BlockSpec((block_m, bn), lambda i, j, k: (i, j)),
        scratch_shapes=[pltpu.VMEM((block_m, bn), jnp.float32)],
        compiler_params=pltpu.CompilerParams(
            dimension_semantics=("parallel", "parallel", "arbitrary"),
            vmem_limit_bytes=vmem_limit),
        cost_estimate=cost,
    )(a, w, b)


def _layered_forward(x_p, prepared, relu_flags, *, block_m, vmem_budget,
                     out_dtype):
    """Fallback when resident weights don't fit VMEM (e.g. v7x 64 MiB):
    per-layer K/N-tiled matmuls, bf16 activations between layers via HBM."""
    h = x_p
    n = len(prepared["w"])
    for i, (w, b) in enumerate(zip(prepared["w"], prepared["b"])):
        last = (i + 1 == n)
        h = _layer_tiled(h, w, b, relu_flags[i], block_m=block_m,
                         out_dtype=(out_dtype if last else jnp.bfloat16),
                         vmem_budget=vmem_budget)
    return h


def mlp_forward(x, prepared, relu_flags, *, block_m=None, force_path=None):
    """x: (B, input_size). prepared: result of prepare_params().
    relu_flags[i]: apply ReLU after layer i."""
    B, in_dim = x.shape
    if in_dim != prepared["in_dim"]:
        raise ValueError("input feature size does not match prepared params")
    relu_flags = tuple(bool(r) for r in relu_flags)
    in_pad = prepared["in_pad"]
    out_pad, out_dim = prepared["out_pad"], prepared["out_dim"]
    dims_pad = prepared["dims_pad"]

    vmem_budget = _vmem_budget()
    single_buf = _single_buffer_supported()

    # ---- batch tile: >=2 grid steps when possible (v7x 2nd TC), big tiles
    #      to amortize per-step overhead, multiples of 16 (bf16 packing). ----
    if block_m is None:
        if B <= 32:
            block_m = _round_up(max(B, 16), 16)
        else:
            block_m = min(512, _round_up(pl.cdiv(B, 2), 16))
    block_m = max(16, _round_up(block_m, 16))

    # ---- fused-path footprint (charges weights with the real buffer count) --
    w_bytes = sum(int(w.size) * 2 for w in prepared["w"])
    b_bytes = sum(int(b.size) * 4 for b in prepared["b"])
    nbuf_w = 1 if single_buf else 2
    max_feat = max([in_pad] + [n for _, n in dims_pad])

    def fused_needed(bm):
        return (2 * bm * in_pad * 2 + 2 * bm * out_pad * 4
                + nbuf_w * (w_bytes + b_bytes) + bm * max_feat * 6)

    while fused_needed(block_m) > vmem_budget and block_m > 64:
        block_m = max(64, _round_up(block_m // 2, 16))

    Bp = _round_up(B, block_m)
    # Input fed as bf16 (MXU operand dtype) -> half the x DMA bytes.
    x_p = (jnp.zeros((Bp, in_pad), jnp.bfloat16)
           .at[:B, :in_dim].set(x.astype(jnp.bfloat16)))

    use_fused = fused_needed(block_m) <= vmem_budget
    if force_path == "fused":
        use_fused = True
    elif force_path == "layered":
        use_fused = False

    if use_fused:
        y = _fused_forward(x_p, prepared, relu_flags, block_m=block_m,
                           single_buf=single_buf, vmem_budget=vmem_budget,
                           out_dtype=x.dtype)
    else:
        y = _layered_forward(x_p, prepared, relu_flags, block_m=block_m,
                             vmem_budget=vmem_budget, out_dtype=x.dtype)
    return y[:B, :out_dim]


def fully_connected_nn_forward(x, weights, biases, relu_flags, *, block_m=None):
    """One-shot convenience API. For repeated inference, call prepare_params()
    once and mlp_forward() per step (avoids per-call pad/cast traffic)."""
    return mlp_forward(x, prepare_params(weights, biases), relu_flags,
                       block_m=block_m)


# ------------------------- module structure / init ------------------------- #

def build_mlp_structure(input_size, layers_sizes, hidden_size):
    """Reproduce FullyConnectedNN.__init__ layer structure exactly."""
    if layers_sizes == [0]:
        dims = [(input_size, hidden_size)]
        relu_flags = [True]
    else:
        dims = [(input_size, layers_sizes[0])]
        relu_flags = [False]  # first Linear has NO ReLU in the reference code
        for i in range(len(layers_sizes) - 1):
            dims.append((layers_sizes[i], layers_sizes[i + 1]))
            relu_flags.append(True)
        dims.append((layers_sizes[-1], hidden_size))
        relu_flags.append(False)
    return dims, relu_flags


def init_params(key, dims):
    """Deterministic init mimicking nn.Linear default: U(-1/sqrt(fan_in), +).
    Weights stored as (in, out) == transposed PyTorch weight."""
    weights, biases = [], []
    for (fan_in, fan_out) in dims:
        key, kw, kb = jax.random.split(key, 3)
        bound = 1.0 / jnp.sqrt(fan_in)
        w = jax.random.uniform(kw, (fan_in, fan_out), jnp.float32, -bound, bound)
        b = jax.random.uniform(kb, (fan_out,), jnp.float32, -bound, bound)
        weights.append(w)
        biases.append(b)
    return weights, biases


# ------------------------------ references --------------------------------- #

def reference_forward(x, weights, biases, relu_flags):
    """Full-f32 math (PyTorch module semantics)."""
    h = x
    for w, b, r in zip(weights, biases, relu_flags):
        h = jnp.dot(h, w, preferred_element_type=jnp.float32) + b
        if r:
            h = jnp.maximum(h, 0.0)
    return h


def reference_forward_bf16like(x, weights, biases, relu_flags):
    """Emulates the kernel numerics: bf16 operands, f32 accumulation,
    bf16 inter-layer activations."""
    n = len(weights)
    h = x.astype(jnp.bfloat16)
    for i, (w, b, r) in enumerate(zip(weights, biases, relu_flags)):
        acc = jnp.dot(h, w.astype(jnp.bfloat16),
                      preferred_element_type=jnp.float32) + b
        if r:
            acc = jnp.maximum(acc, 0.0)
        h = acc.astype(jnp.bfloat16) if i + 1 < n else acc
    return h


# ---------------------------------- main ------------------------------------ #

if __name__ == "__main__":
    # Small, module-consistent configuration; batch=10 exercises ragged
    # batch padding (grid=1), batch=96 exercises a multi-step parallel grid,
    # and a forced "layered" run exercises the K/N-tiled fallback path.
    input_size = 16
    layers_sizes = [32, 64]
    hidden_size = 32

    dims, relu_flags = build_mlp_structure(input_size, layers_sizes, hidden_size)

    key = jax.random.PRNGKey(0)
    key, kx1, kx2 = jax.random.split(key, 3)
    weights, biases = init_params(key, dims)

    prepared = prepare_params(weights, biases)   # pad + bf16-cast ONCE

    def check(x, force_path=None):
        out = jax.block_until_ready(
            mlp_forward(x, prepared, relu_flags, force_path=force_path))
        assert out.shape == (x.shape[0], hidden_size)
        ref_b = reference_forward_bf16like(x, weights, biases, relu_flags)
        ref_f = reference_forward(x, weights, biases, relu_flags)
        assert jnp.allclose(out, ref_b, atol=2e-3, rtol=2e-3), \
            "mismatch vs bf16-emulating reference"
        assert jnp.allclose(out, ref_f, atol=5e-2, rtol=5e-2), \
            "mismatch vs f32 reference"

    x_small = jax.random.normal(kx1, (10, input_size), jnp.float32)
    x_multi = jax.random.normal(kx2, (96, input_size), jnp.float32)

    check(x_small)                         # fused path, grid=(1,)
    check(x_multi)                         # fused path, grid=(2,), parallel
    check(x_small, force_path="layered")   # K/N-tiled fallback path

    print("KERNEL_OK")
</pallas_src>

<mosaic_0001>
module attributes {stable_mosaic.version = 11 : i64} {
  func.func @k(%arg0: i32, %arg1: memref<8x128xf32, #tpu.memory_space<vmem>>, %arg2: memref<8x128xf32, #tpu.memory_space<vmem>>) attributes {dimension_semantics = [#tpu.dimension_semantics<arbitrary>], iteration_bounds = array<i64: 2>, scalar_prefetch = 0 : i64, scratch_operands = 0 : i64, tpu.core_type = #tpu.core_type<tc>, window_params = [{pipeline_mode = #tpu.pipeline_mode<synchronous>, transform_indices = @transform_0, window_bounds = array<i64: 8, 128>}, {transform_indices = @transform_1, window_bounds = array<i64: 8, 128>}]} {
    %c0 = arith.constant 0 : index
    %c0_0 = arith.constant 0 : index
    %0 = vector.load %arg1[%c0, %c0_0] : memref<8x128xf32, #tpu.memory_space<vmem>>, vector<8x128xf32>
    %cst = arith.constant 1.000000e+00 : f32
    %1 = vector.broadcast %cst : f32 to vector<8x128xf32>
    %2 = arith.addf %0, %1 : vector<8x128xf32>
    %c0_1 = arith.constant 0 : index
    %c0_2 = arith.constant 0 : index
    %3 = vector.load %arg2[%c0_1, %c0_2] : memref<8x128xf32, #tpu.memory_space<vmem>>, vector<8x128xf32>
    tpu.vector_store %arg2[%c0_1, %c0_2], %2 {strides = array<i32>} : memref<8x128xf32, #tpu.memory_space<vmem>>, vector<8x128xf32>,
    return
  }
  func.func @transform_0(%arg0: i32) -> (i32, i32) {
    %c0_i32 = arith.constant 0 : i32
    %c0_i32_0 = arith.constant 0 : i32
    %c0_i32_1 = arith.constant 0 : i32
    return %c0_i32, %c0_i32_0 : i32, i32
  }
  func.func @transform_1(%arg0: i32) -> (i32, i32) {
    %c0_i32 = arith.constant 0 : i32
    %c0_i32_0 = arith.constant 0 : i32
    return %arg0, %c0_i32 : i32, i32
  }
}

module attributes {stable_mosaic.version = 11 : i64} {
  func.func @_fused_mlp_kernel(%arg0: i32, %arg1: memref<16x128xbf16, #tpu.memory_space<vmem>>, %arg2: memref<128x128xbf16, #tpu.memory_space<vmem>>, %arg3: memref<1x128xf32, #tpu.memory_space<vmem>>, %arg4: memref<128x128xbf16, #tpu.memory_space<vmem>>, %arg5: memref<1x128xf32, #tpu.memory_space<vmem>>, %arg6: memref<128x128xbf16, #tpu.memory_space<vmem>>, %arg7: memref<1x128xf32, #tpu.memory_space<vmem>>, %arg8: memref<16x128xf32, #tpu.memory_space<vmem>>) attributes {dimension_semantics = [#tpu.dimension_semantics<parallel>], iteration_bounds = array<i64: 1>, scalar_prefetch = 0 : i64, scratch_operands = 0 : i64, tpu.core_type = #tpu.core_type<tc>, window_params = [{transform_indices = @transform_0, window_bounds = array<i64: 16, 128>}, {pipeline_mode = #tpu.pipeline_mode<synchronous>, transform_indices = @transform_1, window_bounds = array<i64: 128, 128>}, {pipeline_mode = #tpu.pipeline_mode<synchronous>, transform_indices = @transform_2, window_bounds = array<i64: 1, 128>}, {pipeline_mode = #tpu.pipeline_mode<synchronous>, transform_indices = @transform_3, window_bounds = array<i64: 128, 128>}, {pipeline_mode = #tpu.pipeline_mode<synchronous>, transform_indices = @transform_4, window_bounds = array<i64: 1, 128>}, {pipeline_mode = #tpu.pipeline_mode<synchronous>, transform_indices = @transform_5, window_bounds = array<i64: 128, 128>}, {pipeline_mode = #tpu.pipeline_mode<synchronous>, transform_indices = @transform_6, window_bounds = array<i64: 1, 128>}, {transform_indices = @transform_7, window_bounds = array<i64: 16, 128>}]} {
    %c0 = arith.constant 0 : index
    %c0_0 = arith.constant 0 : index
    %0 = vector.load %arg1[%c0, %c0_0] : memref<16x128xbf16, #tpu.memory_space<vmem>>, vector<16x128xbf16>
    %c0_1 = arith.constant 0 : index
    %c0_2 = arith.constant 0 : index
    %1 = vector.load %arg2[%c0_1, %c0_2] : memref<128x128xbf16, #tpu.memory_space<vmem>>, vector<128x128xbf16>
    %c0_3 = arith.constant 0 : index
    %c0_4 = arith.constant 0 : index
    %2 = vector.load %arg3[%c0_3, %c0_4] : memref<1x128xf32, #tpu.memory_space<vmem>>, vector<1x128xf32>
    %cst = arith.constant dense<0.000000e+00> : vector<16x128xf32>
    %3 = tpu.matmul %0, %1, %cst {dimension_numbers = #tpu.dot_dimension_numbers<[1], [0], [0], [1], [0, 0, 1, 1], [], []>} : vector<16x128xbf16>, vector<128x128xbf16>, vector<16x128xf32> -> vector<16x128xf32>
    %4 = vector.broadcast %2 : vector<1x128xf32> to vector<16x128xf32>
    %5 = arith.addf %3, %4 : vector<16x128xf32>
    %6 = arith.truncf %5 : vector<16x128xf32> to vector<16x128xbf16>
    %c0_5 = arith.constant 0 : index
    %c0_6 = arith.constant 0 : index
    %7 = vector.load %arg4[%c0_5, %c0_6] : memref<128x128xbf16, #tpu.memory_space<vmem>>, vector<128x128xbf16>
    %c0_7 = arith.constant 0 : index
    %c0_8 = arith.constant 0 : index
    %8 = vector.load %arg5[%c0_7, %c0_8] : memref<1x128xf32, #tpu.memory_space<vmem>>, vector<1x128xf32>
    %cst_9 = arith.constant dense<0.000000e+00> : vector<16x128xf32>
    %9 = tpu.matmul %6, %7, %cst_9 {dimension_numbers = #tpu.dot_dimension_numbers<[1], [0], [0], [1], [0, 0, 1, 1], [], []>} : vector<16x128xbf16>, vector<128x128xbf16>, vector<16x128xf32> -> vector<16x128xf32>
    %10 = vector.broadcast %8 : vector<1x128xf32> to vector<16x128xf32>
    %11 = arith.addf %9, %10 : vector<16x128xf32>
    %cst_10 = arith.constant 0.000000e+00 : f32
    %12 = vector.broadcast %cst_10 : f32 to vector<16x128xf32>
    %13 = arith.maximumf %11, %12 : vector<16x128xf32>
    %14 = arith.truncf %13 : vector<16x128xf32> to vector<16x128xbf16>
    %c0_11 = arith.constant 0 : index
    %c0_12 = arith.constant 0 : index
    %15 = vector.load %arg6[%c0_11, %c0_12] : memref<128x128xbf16, #tpu.memory_space<vmem>>, vector<128x128xbf16>
    %c0_13 = arith.constant 0 : index
    %c0_14 = arith.constant 0 : index
    %16 = vector.load %arg7[%c0_13, %c0_14] : memref<1x128xf32, #tpu.memory_space<vmem>>, vector<1x128xf32>
    %cst_15 = arith.constant dense<0.000000e+00> : vector<16x128xf32>
    %17 = tpu.matmul %14, %15, %cst_15 {dimension_numbers = #tpu.dot_dimension_numbers<[1], [0], [0], [1], [0, 0, 1, 1], [], []>} : vector<16x128xbf16>, vector<128x128xbf16>, vector<16x128xf32> -> vector<16x128xf32>
    %18 = vector.broadcast %16 : vector<1x128xf32> to vector<16x128xf32>
    %19 = arith.addf %17, %18 : vector<16x128xf32>
    %c0_16 = arith.constant 0 : index
    %c0_17 = arith.constant 0 : index
    %20 = vector.load %arg8[%c0_16, %c0_17] : memref<16x128xf32, #tpu.memory_space<vmem>>, vector<16x128xf32>
    tpu.vector_store %arg8[%c0_16, %c0_17], %19 {strides = array<i32>} : memref<16x128xf32, #tpu.memory_space<vmem>>, vector<16x128xf32>,
    return
  }
  func.func @transform_0(%arg0: i32) -> (i32, i32) {
    %c0_i32 = arith.constant 0 : i32
    %c0_i32_0 = arith.constant 0 : i32
    return %arg0, %c0_i32 : i32, i32
  }
  func.func @transform_1(%arg0: i32) -> (i32, i32) {
    %c0_i32 = arith.constant 0 : i32
    %c0_i32_0 = arith.constant 0 : i32
    %c0_i32_1 = arith.constant 0 : i32
    return %c0_i32, %c0_i32_0 : i32, i32
  }
  func.func @transform_2(%arg0: i32) -> (i32, i32) {
    %c0_i32 = arith.constant 0 : i32
    %c0_i32_0 = arith.constant 0 : i32
    %c0_i32_1 = arith.constant 0 : i32
    return %c0_i32, %c0_i32_0 : i32, i32
  }
  func.func @transform_3(%arg0: i32) -> (i32, i32) {
    %c0_i32 = arith.constant 0 : i32
    %c0_i32_0 = arith.constant 0 : i32
    %c0_i32_1 = arith.constant 0 : i32
    return %c0_i32, %c0_i32_0 : i32, i32
  }
  func.func @transform_4(%arg0: i32) -> (i32, i32) {
    %c0_i32 = arith.constant 0 : i32
    %c0_i32_0 = arith.constant 0 : i32
    %c0_i32_1 = arith.constant 0 : i32
    return %c0_i32, %c0_i32_0 : i32, i32
  }
  func.func @transform_5(%arg0: i32) -> (i32, i32) {
    %c0_i32 = arith.constant 0 : i32
    %c0_i32_0 = arith.constant 0 : i32
    %c0_i32_1 = arith.constant 0 : i32
    return %c0_i32, %c0_i32_0 : i32, i32
  }
  func.func @transform_6(%arg0: i32) -> (i32, i32) {
    %c0_i32 = arith.constant 0 : i32
    %c0_i32_0 = arith.constant 0 : i32
    %c0_i32_1 = arith.constant 0 : i32
    return %c0_i32, %c0_i32_0 : i32, i32
  }
  func.func @transform_7(%arg0: i32) -> (i32, i32) {
    %c0_i32 = arith.constant 0 : i32
    %c0_i32_0 = arith.constant 0 : i32
    return %arg0, %c0_i32 : i32, i32
  }
}

</mosaic_0001>

<llo_original>
// kernel: tpu_custom_call.1
$region0: #{tpu_custom_call.1}
  #allocation0 [shape = 'u32[]', space=smem, size = 0x4, offset = 0x4, fixed_abs, tag = 'smem constant byte address 0x4 - core index']
  #allocation1 [shape = 'u32[144,128]{1,0:T(1,128)}', space=vmem, size = 0x12000, scoped, tag = 'internal scratch']
  %s0 = inlined_call_operand.hbm [shape: f32[8,128], index: 0, kind: input, shape index: {}]
  %s1 = inlined_call_operand.hbm [shape: f32[16,128], index: 1, kind: output, shape index: {}]
  %s2 = sld [smem:[#allocation0]]
  $region41: #{tpu_custom_call.1} parent=0
    _
  %s4 = ssub.s32 1, %s2
  %s5 = scalar_select 0, %s4, %s2
  $region1: #{tpu_custom_call.1} parent=0
    #allocation2 [shape = 'u8[4096]{0}', space=vmem, size = 0x1000, scoped, tag = 'input window, operand 0, single buffered']
    #allocation3 [shape = 's32[2]{0}', space=sflag, size = 0x8, scoped, tag = 'scoped memory for tpu_custom_call.1']
    #allocation4 [shape = 's32[2]{0}', space=sflag, size = 0x8, scoped, tag = 'scoped memory for tpu_custom_call.1']
    #allocation5 [shape = 'u8[8192]{0}', space=vmem, size = 0x2000, scoped, tag = 'output window, operand 0']
    %6 = vsyncpa [#allocation3], 0
    %7 = vsyncpa [#allocation4], 0
    %s8 = scalar_lea.sflag [#allocation4], 1
    %9 = vsyncpa %s8, 0
    loop: start=0, step=1, limit=4
    $region2: #{tpu_custom_call.1} parent=1 // loop_pre_header
      _
    $region3: #{tpu_custom_call.1} parent=1 // loop_header
      %s11 = sphi 0, %s15
      %p12 = scmp.ge.s32.totalorder %s11, 4
      %s19 = sphi 0, %s19
      %s21 = sphi 0, %s19
      %s22 = sphi 0, %s21
      %s36 = sphi 0, %s22
      %s42 = sphi 0, %s44
      %s45 = sphi 0, %s42
      %s46 = sphi 0, %s45
      %s62 = sphi 0, %s46
    $region4: #{tpu_custom_call.1} parent=1 // loop_header_branch
      %14 = sbr.rel (%p12) target = $region8
    $region5: #{tpu_custom_call.1} parent=1 // loop_body
      %s16 = ssub.s32 %s11, 1
      %s17 = ssub.s32 %s11, 2
      %s18 = sadd.s32 %s11, 1
      %s20 = sadd.s32 %s19, 1
      %p23 = scmp.eq.s32.totalorder %s11, 1
      %p24 = scmp.ne.s32.totalorder %s19, %s21
      %p25 = scmp.eq.s32.totalorder %s11, 0
      %p26 = por %p24, %p25
      %p27 = scmp.ne.s32.totalorder %s19, %s21
      %p28 = scmp.eq.s32.totalorder %s16, 1
      %p29 = por %p27, %p28
      %p30 = scmp.ne.s32.totalorder %s21, %s22
      %p31 = scmp.eq.s32.totalorder %s16, 0
      %p32 = por %p30, %p31
      %p33 = scmp.ne.s32.totalorder %s21, %s22
      %p34 = scmp.eq.s32.totalorder %s17, 1
      %p35 = por %p33, %p34
      %p37 = scmp.ne.s32.totalorder %s22, %s36
      %p38 = scmp.eq.s32.totalorder %s17, 0
      %p39 = por %p37, %p38
      %s40 = ssub.s32 %s11, %s18
      %p41 = scmp.eq.s32.totalorder %s40, 0
      %s43 = sadd.s32 %s42, 1
      %s44 = scalar_select %p41, %s42, %s43
      %p47 = pneg %p41
      %p48 = scmp.eq.s32.totalorder %s11, 1
      %p49 = por %p47, %p48
      %p50 = scmp.ne.s32.totalorder %s42, %s45
      %p51 = scmp.eq.s32.totalorder %s11, 0
      %p52 = por %p50, %p51
      %p53 = scmp.ne.s32.totalorder %s42, %s45
      %p54 = scmp.eq.s32.totalorder %s16, 1
      %p55 = por %p53, %p54
      %p56 = scmp.ne.s32.totalorder %s45, %s46
      %p57 = scmp.eq.s32.totalorder %s16, 0
      %p58 = por %p56, %p57
      %p59 = scmp.ne.s32.totalorder %s45, %s46
      %p60 = scmp.eq.s32.totalorder %s17, 1
      %p61 = por %p59, %p60
      %p63 = scmp.ne.s32.totalorder %s46, %s62
      %p64 = scmp.eq.s32.totalorder %s17, 0
      %p65 = por %p63, %p64
      %p66 = scmp.le.s32.totalorder 1, %s11
      %p67 = scmp.lt.s32.totalorder %s11, 3
      %p68 = pnand %p66, %p67
      %p69 = pneg %p68
      // Predicated region
      $region9: #{tpu_custom_call.1} parent=5 // pred_check
        _
      $region10: #{tpu_custom_call.1} parent=5 // pred_check_branch
        %71 = sbr.rel (%p68) target = $region12
      $region11: #{tpu_custom_call.1} parent=5 // pred_region
        %s72 = ssub.s32 %s11, 1
        // Predicated region
        $region13: #{tpu_custom_call.1} parent=11 // pred_check
          %p73 = pneg %p32
        $region14: #{tpu_custom_call.1} parent=11 // pred_check_branch
          %75 = sbr.rel (%p73) target = $region16
        $region15: #{tpu_custom_call.1} parent=11 // pred_region
          %s77 = ssub.s32 128, 128
          %78 = vsyncadd [#allocation3], %s77
          %s80 = sshll.u32 [#allocation2], 4
          %s81 = int_to_ptr.vmem [resolvable:$true] %s80
          %83 = dma.hbm_to_vmem [thread:$0]  %s0, 128, %s81, [#allocation3]
        $region16: #{tpu_custom_call.1} parent=11 // pred_fallthru
          _
      $region12: #{tpu_custom_call.1} parent=5 // pred_fallthru
        _
      %p84 = scmp.lt.s32.totalorder %s11, 2
      // Predicated region
      $region17: #{tpu_custom_call.1} parent=5 // pred_check
        %p85 = pneg %p84
      $region18: #{tpu_custom_call.1} parent=5 // pred_check_branch
        %87 = sbr.rel (%p85) target = $region20
      $region19: #{tpu_custom_call.1} parent=5 // pred_region
        _
      $region20: #{tpu_custom_call.1} parent=5 // pred_fallthru
        _
      %p88 = scmp.le.s32.totalorder 1, %s11
      %p89 = scmp.lt.s32.totalorder %s11, 3
      %p90 = pnand %p88, %p89
      %p91 = pneg %p90
      // Predicated region
      $region21: #{tpu_custom_call.1} parent=5 // pred_check
        _
      $region22: #{tpu_custom_call.1} parent=5 // pred_check_branch
        %93 = sbr.rel (%p90) target = $region24
      $region23: #{tpu_custom_call.1} parent=5 // pred_region
        %s94 = ssub.s32 %s11, 1
        // Predicated region
        $region25: #{tpu_custom_call.1} parent=23 // pred_check
          %p95 = pneg %p32
        $region26: #{tpu_custom_call.1} parent=23 // pred_check_branch
          %97 = sbr.rel (%p95) target = $region28
        $region27: #{tpu_custom_call.1} parent=23 // pred_region
          %98 = dma.done [#allocation3], 128
        $region28: #{tpu_custom_call.1} parent=23 // pred_fallthru
          _
        %p99 = pneg %p32
        %p100 = pneg %p29
        %p101 = pneg %p58
        %p102 = pneg %p55
        %s103 = sand.u32 %s45, 1
        %s104 = scalar_lea.sflag [#allocation4], %s103
        %s105 = sand.u32 %s45, 1
        %s106 = smul.addr %s105, 8
        %s107 = scalar_lea.vmem [#allocation5], %s106
        %v108 = vld [vmem:[#allocation2] sm:$0xff]
        %v109 = vadd.f32 %v108, 1.0
        %110 = vst [vmem:[%s107] sm:$0xff] %v109
        %s111 = sand.u32 %s45, 1
        %s112 = scalar_lea.sflag [#allocation4], %s111
        %s113 = sand.u32 %s45, 1
        %s114 = smul.addr %s113, 8
        %s115 = scalar_lea.vmem [#allocation5], %s114
        // Predicated region
        $region29: #{tpu_custom_call.1} parent=23 // pred_check
          %p116 = pneg %p55
        $region30: #{tpu_custom_call.1} parent=23 // pred_check_branch
          %118 = sbr.rel (%p116) target = $region32
        $region31: #{tpu_custom_call.1} parent=23 // pred_region
          %s120 = ssub.s32 128, 128
          %121 = vsyncadd %s112, %s120
          %s122 = smul.addr %s16, 128
          %s123 = scalar_lea.hbm %s1, %s122
          %s125 = sshll.u32 %s115, 4
          %s126 = int_to_ptr.vmem [resolvable:$true] %s125
          %128 = dma.vmem_to_hbm [thread:$0]  %s126, 128, %s123, %s112
        $region32: #{tpu_custom_call.1} parent=23 // pred_fallthru
          _
      $region24: #{tpu_custom_call.1} parent=5 // pred_fallthru
        _
      %p129 = scmp.le.s32.totalorder 2, %s11
      // Predicated region
      $region33: #{tpu_custom_call.1} parent=5 // pred_check
        %p130 = pneg %p129
      $region34: #{tpu_custom_call.1} parent=5 // pred_check_branch
        %132 = sbr.rel (%p130) target = $region36
      $region35: #{tpu_custom_call.1} parent=5 // pred_region
        %s133 = ssub.s32 %s11, 2
        // Predicated region
        $region37: #{tpu_custom_call.1} parent=35 // pred_check
          %p134 = pneg %p61
        $region38: #{tpu_custom_call.1} parent=35 // pred_check_branch
          %136 = sbr.rel (%p134) target = $region40
        $region39: #{tpu_custom_call.1} parent=35 // pred_region
          %s137 = sand.u32 %s46, 1
          %s138 = scalar_lea.sflag [#allocation4], %s137
          %s139 = sand.u32 %s46, 1
          %s140 = smul.addr %s139, 8
          %s141 = scalar_lea.vmem [#allocation5], %s140
          %142 = dma.done %s138, 128
        $region40: #{tpu_custom_call.1} parent=35 // pred_fallthru
          _
      $region36: #{tpu_custom_call.1} parent=5 // pred_fallthru
        _
    $region6: #{tpu_custom_call.1} parent=1 // loop_footer
      %s15 = sadd.s32 1, %s11
    $region7: #{tpu_custom_call.1} parent=1 // loop_footer_branch
      %10 = sbr.rel target = $region3
    $region8: #{tpu_custom_call.1} parent=1 // loop_exit
      _
    %143 = vsyncpa [#allocation3], 1
    %s144 = scalar_lea.sflag [#allocation3], 1
    %145 = vsyncpa %s144, 1
    %146 = vsyncpa [#allocation4], 1
    %s147 = scalar_lea.sflag [#allocation4], 1
    %148 = vsyncpa %s147, 1

// kernel: tpu_custom_call.1
$region0: #{tpu_custom_call.1}
  #allocation0 [shape = 'u32[]', space=smem, size = 0x4, offset = 0x4, fixed_abs, tag = 'smem constant byte address 0x4 - core index']
  #allocation1 [shape = 'u32[144,128]{1,0:T(1,128)}', space=vmem, size = 0x12000, scoped, tag = 'internal scratch']
  %s0 = inlined_call_operand.hbm [shape: bf16[16,128], index: 0, kind: input, shape index: {}]
  %s1 = inlined_call_operand.hbm [shape: bf16[128,128], index: 1, kind: input, shape index: {}]
  %s2 = inlined_call_operand.vmem [shape: f32[1,128], index: 2, kind: input, shape index: {}]
  %s3 = inlined_call_operand.hbm [shape: bf16[128,128], index: 3, kind: input, shape index: {}]
  %s4 = inlined_call_operand.vmem [shape: f32[1,128], index: 4, kind: input, shape index: {}]
  %s5 = inlined_call_operand.hbm [shape: bf16[128,128], index: 5, kind: input, shape index: {}]
  %s6 = inlined_call_operand.vmem [shape: f32[1,128], index: 6, kind: input, shape index: {}]
  %s7 = inlined_call_operand.hbm [shape: f32[16,128], index: 7, kind: output, shape index: {}]
  %s8 = sld [smem:[#allocation0]]
  $region54: #{tpu_custom_call.1} parent=0
    _
  %s10 = ssub.s32 1, %s8
  %s11 = scalar_select 0, %s10, %s8
  $region1: #{tpu_custom_call.1} parent=0
    #allocation2 [shape = 'u8[4096]{0}', space=vmem, size = 0x1000, scoped, tag = 'input window, operand 0, single buffered']
    #allocation3 [shape = 's32[1]{0}', space=sflag, size = 0x4, scoped, tag = 'scoped memory for tpu_custom_call.1']
    #allocation4 [shape = 's32[1]{0}', space=sflag, size = 0x4, scoped, tag = 'scoped memory for tpu_custom_call.1']
    #allocation5 [shape = 'u8[32768]{0}', space=vmem, size = 0x8000, scoped, tag = 'input window, operand 1, single buffered']
    #allocation6 [shape = 's32[1]{0}', space=sflag, size = 0x4, scoped, tag = 'scoped memory for tpu_custom_call.1']
    #allocation7 [shape = 'u8[32768]{0}', space=vmem, size = 0x8000, scoped, tag = 'input window, operand 3, single buffered']
    #allocation8 [shape = 'u8[32768]{0}', space=vmem, size = 0x8000, scoped, tag = 'input window, operand 5, single buffered']
    #allocation9 [shape = 's32[1]{0}', space=sflag, size = 0x4, scoped, tag = 'scoped memory for tpu_custom_call.1']
    #allocation10 [shape = 'u8[8192]{0}', space=vmem, size = 0x2000, scoped, tag = 'output window, operand 0, single buffered']
    %12 = vsyncpa [#allocation3], 0
    %13 = vsyncpa [#allocation6], 0
    %14 = vsyncpa [#allocation9], 0
    %15 = vsyncpa [#allocation4], 0
    // Predicated region
    $region2: #{tpu_custom_call.1} parent=1 // pred_check
      _
    $region3: #{tpu_custom_call.1} parent=1 // pred_check_branch
      %17 = sbr.rel (0) target = $region5
    $region4: #{tpu_custom_call.1} parent=1 // pred_region
      %s19 = ssub.s32 128, 128
      %20 = vsyncadd [#allocation3], %s19
      %s21 = sshll.u32 [#allocation2], 4
      %s22 = int_to_ptr.vmem [resolvable:$true] %s21
      %27 = dma.hbm_to_vmem [thread:$0]  %s0, 128, %s22, [#allocation3], 64, 64, 4
    $region5: #{tpu_custom_call.1} parent=1 // pred_fallthru
      _
    // Predicated region
    $region6: #{tpu_custom_call.1} parent=1 // pred_check
      _
    $region7: #{tpu_custom_call.1} parent=1 // pred_check_branch
      %29 = sbr.rel (0) target = $region9
    $region8: #{tpu_custom_call.1} parent=1 // pred_region
      %s31 = ssub.s32 1024, 1024
      %32 = vsyncadd [#allocation6], %s31
      %s33 = sshll.u32 [#allocation5], 4
      %s34 = int_to_ptr.vmem [resolvable:$true] %s33
      %39 = dma.hbm_to_vmem [thread:$0]  %s1, 1024, %s34, [#allocation6], 64, 64, 4
    $region9: #{tpu_custom_call.1} parent=1 // pred_fallthru
      _
    // Predicated region
    $region10: #{tpu_custom_call.1} parent=1 // pred_check
      _
    $region11: #{tpu_custom_call.1} parent=1 // pred_check_branch
      %41 = sbr.rel (0) target = $region13
    $region12: #{tpu_custom_call.1} parent=1 // pred_region
      _
    $region13: #{tpu_custom_call.1} parent=1 // pred_fallthru
      _
    // Predicated region
    $region14: #{tpu_custom_call.1} parent=1 // pred_check
      _
    $region15: #{tpu_custom_call.1} parent=1 // pred_check_branch
      %43 = sbr.rel (0) target = $region17
    $region16: #{tpu_custom_call.1} parent=1 // pred_region
      %s45 = ssub.s32 1024, 1024
      %46 = vsyncadd [#allocation6], %s45
      %s47 = sshll.u32 [#allocation7], 4
      %s48 = int_to_ptr.vmem [resolvable:$true] %s47
      %53 = dma.hbm_to_vmem [thread:$0]  %s3, 1024, %s48, [#allocation6], 64, 64, 4
    $region17: #{tpu_custom_call.1} parent=1 // pred_fallthru
      _
    // Predicated region
    $region18: #{tpu_custom_call.1} parent=1 // pred_check
      _
    $region19: #{tpu_custom_call.1} parent=1 // pred_check_branch
      %55 = sbr.rel (0) target = $region21
    $region20: #{tpu_custom_call.1} parent=1 // pred_region
      _
    $region21: #{tpu_custom_call.1} parent=1 // pred_fallthru
      _
    // Predicated region
    $region22: #{tpu_custom_call.1} parent=1 // pred_check
      _
    $region23: #{tpu_custom_call.1} parent=1 // pred_check_branch
      %57 = sbr.rel (0) target = $region25
    $region24: #{tpu_custom_call.1} parent=1 // pred_region
      %s59 = ssub.s32 1024, 1024
      %60 = vsyncadd [#allocation9], %s59
      %s61 = sshll.u32 [#allocation8], 4
      %s62 = int_to_ptr.vmem [resolvable:$true] %s61
      %67 = dma.hbm_to_vmem [thread:$0]  %s5, 1024, %s62, [#allocation9], 64, 64, 4
    $region25: #{tpu_custom_call.1} parent=1 // pred_fallthru
      _
    // Predicated region
    $region26: #{tpu_custom_call.1} parent=1 // pred_check
      _
    $region27: #{tpu_custom_call.1} parent=1 // pred_check_branch
      %69 = sbr.rel (0) target = $region29
    $region28: #{tpu_custom_call.1} parent=1 // pred_region
      _
    $region29: #{tpu_custom_call.1} parent=1 // pred_fallthru
      _
    // Predicated region
    $region30: #{tpu_custom_call.1} parent=1 // pred_check
      _
    $region31: #{tpu_custom_call.1} parent=1 // pred_check_branch
      %71 = sbr.rel (0) target = $region33
    $region32: #{tpu_custom_call.1} parent=1 // pred_region
      %72 = dma.done [#allocation3], 128
    $region33: #{tpu_custom_call.1} parent=1 // pred_fallthru
      _
    // Predicated region
    $region34: #{tpu_custom_call.1} parent=1 // pred_check
      _
    $region35: #{tpu_custom_call.1} parent=1 // pred_check_branch
      %74 = sbr.rel (0) target = $region37
    $region36: #{tpu_custom_call.1} parent=1 // pred_region
      %75 = dma.done [#allocation6], 1024
    $region37: #{tpu_custom_call.1} parent=1 // pred_fallthru
      _
    // Predicated region
    $region38: #{tpu_custom_call.1} parent=1 // pred_check
      _
    $region39: #{tpu_custom_call.1} parent=1 // pred_check_branch
      %77 = sbr.rel (0) target = $region41
    $region40: #{tpu_custom_call.1} parent=1 // pred_region
      %78 = dma.done [#allocation6], 1024
    $region41: #{tpu_custom_call.1} parent=1 // pred_fallthru
      _
    // Predicated region
    $region42: #{tpu_custom_call.1} parent=1 // pred_check
      _
    $region43: #{tpu_custom_call.1} parent=1 // pred_check_branch
      %80 = sbr.rel (0) target = $region45
    $region44: #{tpu_custom_call.1} parent=1 // pred_region
      %81 = dma.done [#allocation9], 1024
    $region45: #{tpu_custom_call.1} parent=1 // pred_fallthru
      _
    %v83 = vld [vmem:[#allocation2] sm:$0xf]
    %v84 = vld [vmem:[#allocation2 + $0x4] sm:$0xf]
    %v85 = vld [vmem:[#allocation5] sm:$0xf]
    %v86 = vld [vmem:[#allocation5 + $0x4] sm:$0xf]
    %v87 = vld [vmem:[#allocation5 + $0x8] sm:$0xf]
    %v88 = vld [vmem:[#allocation5 + $0xc] sm:$0xf]
    %v89 = vld [vmem:[#allocation5 + $0x10] sm:$0xf]
    %v90 = vld [vmem:[#allocation5 + $0x14] sm:$0xf]
    %v91 = vld [vmem:[#allocation5 + $0x18] sm:$0xf]
    %v92 = vld [vmem:[#allocation5 + $0x1c] sm:$0xf]
    %v93 = vld [vmem:[#allocation5 + $0x20] sm:$0xf]
    %v94 = vld [vmem:[#allocation5 + $0x24] sm:$0xf]
    %v95 = vld [vmem:[#allocation5 + $0x28] sm:$0xf]
    %v96 = vld [vmem:[#allocation5 + $0x2c] sm:$0xf]
    %v97 = vld [vmem:[#allocation5 + $0x30] sm:$0xf]
    %v98 = vld [vmem:[#allocation5 + $0x34] sm:$0xf]
    %v99 = vld [vmem:[#allocation5 + $0x38] sm:$0xf]
    %v100 = vld [vmem:[#allocation5 + $0x3c] sm:$0xf]
    %v101 = vld [vmem:[%s2] sm:$0x1]
    %v103 = vlaneseq
    %v104 = vshrl.u32 %v103, 7
    %v105 = vsub.s32 0, %v104
    %v106 = vrot.slane %v101, %v105
    %v110 = vunpack.c.l.b16 %v83
    %v111 = vunpack.c.l.b16 %v84
    %v112 = vpack.c.b16 %v111, %v110
    %v130 = vunpack.c.l.b16 %v85
    %v131 = vunpack.c.l.b16 %v86
    %v132 = vunpack.c.l.b16 %v87
    %v133 = vunpack.c.l.b16 %v88
    %v134 = vunpack.c.l.b16 %v89
    %v135 = vunpack.c.l.b16 %v90
    %v136 = vunpack.c.l.b16 %v91
    %v137 = vunpack.c.l.b16 %v92
    %v138 = vunpack.c.l.b16 %v93
    %v139 = vunpack.c.l.b16 %v94
    %v140 = vunpack.c.l.b16 %v95
    %v141 = vunpack.c.l.b16 %v96
    %v142 = vunpack.c.l.b16 %v97
    %v143 = vunpack.c.l.b16 %v98
    %v144 = vunpack.c.l.b16 %v99
    %v145 = vunpack.c.l.b16 %v100
    %v146 = vpack.c.b16 %v131, %v130
    %v147 = vpack.c.b16 %v133, %v132
    %v148 = vpack.c.b16 %v135, %v134
    %v149 = vpack.c.b16 %v137, %v136
    %v150 = vpack.c.b16 %v139, %v138
    %v151 = vpack.c.b16 %v141, %v140
    %v152 = vpack.c.b16 %v143, %v142
    %v153 = vpack.c.b16 %v145, %v144
    %162 = vmatprep.subr.bf16.mxu0 0
    %163 = vmatpush1.bf16.msra.mxu0 %v153
    %164 = vmatprep.subr.bf16.mxu0 0
    %165 = vmatpush1.bf16.msra.mxu0 %v152
    %166 = vmatprep.subr.bf16.mxu0 0
    %167 = vmatpush1.bf16.msra.mxu0 %v151
    %168 = vmatprep.subr.bf16.mxu0 0
    %169 = vmatpush1.bf16.msra.mxu0 %v150
    %170 = vmatprep.subr.bf16.mxu0 0
    %171 = vmatpush1.bf16.msra.mxu0 %v149
    %172 = vmatprep.subr.bf16.mxu0 0
    %173 = vmatpush1.bf16.msra.mxu0 %v148
    %174 = vmatprep.subr.bf16.mxu0 0
    %175 = vmatpush1.bf16.msra.mxu0 %v147
    %176 = vmatprep.subr.bf16.mxu0 0
    %177 = vmatpush1.bf16.msra.mxu0 %v146
    %178 = vmatprep.subr.bf16.mxu0 0
    %179 = vmatpush2.bf16.msra.mxu0 0
    %180 = vmatprep.subr.bf16.mxu0 0
    %181 = vmatpush2.bf16.msra.mxu0 0
    %182 = vmatprep.subr.bf16.mxu0 0
    %183 = vmatpush2.bf16.msra.mxu0 0
    %184 = vmatprep.subr.bf16.mxu0 0
    %185 = vmatpush2.bf16.msra.mxu0 0
    %186 = vmatprep.subr.bf16.mxu0 0
    %187 = vmatpush2.bf16.msra.mxu0 0
    %188 = vmatprep.subr.bf16.mxu0 0
    %189 = vmatpush2.bf16.msra.mxu0 0
    %190 = vmatprep.subr.bf16.mxu0 0
    %191 = vmatpush2.bf16.msra.mxu0 0
    %192 = vmatprep.subr.bf16.mxu0 0
    %193 = vmatpush2.bf16.msra.mxu0 0
    %194 = vmatprep.mubr.bf16.mxu0 0
    %195 = vmatmul.mubr.bf16.gmra.mxu0 %v112
    %v196 = vpop.f32.mrf.mxu0
    %v197 = vadd.f32 %v106, %v196
    %v198 = vpop.f32.mrf.mxu0
    %v199 = vpop.f32.mrf.mxu0
    %v200 = vadd.f32 %v106, %v199
    %v201 = vpop.f32.mrf.mxu0
    %202 = vdwg.mxu0
    %v203 = vpack.c.bf16 %v200, %v197
    %v204 = vld [vmem:[#allocation7] sm:$0xf]
    %v205 = vld [vmem:[#allocation7 + $0x4] sm:$0xf]
    %v206 = vld [vmem:[#allocation7 + $0x8] sm:$0xf]
    %v207 = vld [vmem:[#allocation7 + $0xc] sm:$0xf]
    %v208 = vld [vmem:[#allocation7 + $0x10] sm:$0xf]
    %v209 = vld [vmem:[#allocation7 + $0x14] sm:$0xf]
    %v210 = vld [vmem:[#allocation7 + $0x18] sm:$0xf]
    %v211 = vld [vmem:[#allocation7 + $0x1c] sm:$0xf]
    %v212 = vld [vmem:[#allocation7 + $0x20] sm:$0xf]
    %v213 = vld [vmem:[#allocation7 + $0x24] sm:$0xf]
    %v214 = vld [vmem:[#allocation7 + $0x28] sm:$0xf]
    %v215 = vld [vmem:[#allocation7 + $0x2c] sm:$0xf]
    %v216 = vld [vmem:[#allocation7 + $0x30] sm:$0xf]
    %v217 = vld [vmem:[#allocation7 + $0x34] sm:$0xf]
    %v218 = vld [vmem:[#allocation7 + $0x38] sm:$0xf]
    %v219 = vld [vmem:[#allocation7 + $0x3c] sm:$0xf]
    %v220 = vld [vmem:[%s4] sm:$0x1]
    %v222 = vlaneseq
    %v223 = vshrl.u32 %v222, 7
    %v224 = vsub.s32 0, %v223
    %v225 = vrot.slane %v220, %v224
    %v243 = vunpack.c.l.b16 %v204
    %v244 = vunpack.c.l.b16 %v205
    %v245 = vunpack.c.l.b16 %v206
    %v246 = vunpack.c.l.b16 %v207
    %v247 = vunpack.c.l.b16 %v208
    %v248 = vunpack.c.l.b16 %v209
    %v249 = vunpack.c.l.b16 %v210
    %v250 = vunpack.c.l.b16 %v211
    %v251 = vunpack.c.l.b16 %v212
    %v252 = vunpack.c.l.b16 %v213
    %v253 = vunpack.c.l.b16 %v214
    %v254 = vunpack.c.l.b16 %v215
    %v255 = vunpack.c.l.b16 %v216
    %v256 = vunpack.c.l.b16 %v217
    %v257 = vunpack.c.l.b16 %v218
    %v258 = vunpack.c.l.b16 %v219
    %v259 = vpack.c.b16 %v244, %v243
    %v260 = vpack.c.b16 %v246, %v245
    %v261 = vpack.c.b16 %v248, %v247
    %v262 = vpack.c.b16 %v250, %v249
    %v263 = vpack.c.b16 %v252, %v251
    %v264 = vpack.c.b16 %v254, %v253
    %v265 = vpack.c.b16 %v256, %v255
    %v266 = vpack.c.b16 %v258, %v257
    %275 = vmatprep.subr.bf16.mxu0 0
    %276 = vmatpush1.bf16.msra.mxu0 %v266
    %277 = vmatprep.subr.bf16.mxu0 0
    %278 = vmatpush1.bf16.msra.mxu0 %v265
    %279 = vmatprep.subr.bf16.mxu0 0
    %280 = vmatpush1.bf16.msra.mxu0 %v264
    %281 = vmatprep.subr.bf16.mxu0 0
    %282 = vmatpush1.bf16.msra.mxu0 %v263
    %283 = vmatprep.subr.bf16.mxu0 0
    %284 = vmatpush1.bf16.msra.mxu0 %v262
    %285 = vmatprep.subr.bf16.mxu0 0
    %286 = vmatpush1.bf16.msra.mxu0 %v261
    %287 = vmatprep.subr.bf16.mxu0 0
    %288 = vmatpush1.bf16.msra.mxu0 %v260
    %289 = vmatprep.subr.bf16.mxu0 0
    %290 = vmatpush1.bf16.msra.mxu0 %v259
    %291 = vmatprep.subr.bf16.mxu0 0
    %292 = vmatpush2.bf16.msra.mxu0 0
    %293 = vmatprep.subr.bf16.mxu0 0
    %294 = vmatpush2.bf16.msra.mxu0 0
    %295 = vmatprep.subr.bf16.mxu0 0
    %296 = vmatpush2.bf16.msra.mxu0 0
    %297 = vmatprep.subr.bf16.mxu0 0
    %298 = vmatpush2.bf16.msra.mxu0 0
    %299 = vmatprep.subr.bf16.mxu0 0
    %300 = vmatpush2.bf16.msra.mxu0 0
    %301 = vmatprep.subr.bf16.mxu0 0
    %302 = vmatpush2.bf16.msra.mxu0 0
    %303 = vmatprep.subr.bf16.mxu0 0
    %304 = vmatpush2.bf16.msra.mxu0 0
    %305 = vmatprep.subr.bf16.mxu0 0
    %306 = vmatpush2.bf16.msra.mxu0 0
    %307 = vmatprep.mubr.bf16.mxu0 0
    %308 = vmatmul.mubr.bf16.gmra.mxu0 %v203
    %v309 = vpop.f32.mrf.mxu0
    %v310 = vadd.f32 %v225, %v309
    %v311 = vpop.f32.mrf.mxu0
    %v312 = vpop.f32.mrf.mxu0
    %v313 = vadd.f32 %v225, %v312
    %v314 = vpop.f32.mrf.mxu0
    %315 = vdwg.mxu0
    %v316 = vmax.f32 %v310, 0.0
    %v317 = vmax.f32 %v313, 0.0
    %v318 = vpack.c.bf16 %v317, %v316
    %v319 = vld [vmem:[#allocation8] sm:$0xf]
    %v320 = vld [vmem:[#allocation8 + $0x4] sm:$0xf]
    %v321 = vld [vmem:[#allocation8 + $0x8] sm:$0xf]
    %v322 = vld [vmem:[#allocation8 + $0xc] sm:$0xf]
    %v323 = vld [vmem:[#allocation8 + $0x10] sm:$0xf]
    %v324 = vld [vmem:[#allocation8 + $0x14] sm:$0xf]
    %v325 = vld [vmem:[#allocation8 + $0x18] sm:$0xf]
    %v326 = vld [vmem:[#allocation8 + $0x1c] sm:$0xf]
    %v327 = vld [vmem:[#allocation8 + $0x20] sm:$0xf]
    %v328 = vld [vmem:[#allocation8 + $0x24] sm:$0xf]
    %v329 = vld [vmem:[#allocation8 + $0x28] sm:$0xf]
    %v330 = vld [vmem:[#allocation8 + $0x2c] sm:$0xf]
    %v331 = vld [vmem:[#allocation8 + $0x30] sm:$0xf]
    %v332 = vld [vmem:[#allocation8 + $0x34] sm:$0xf]
    %v333 = vld [vmem:[#allocation8 + $0x38] sm:$0xf]
    %v334 = vld [vmem:[#allocation8 + $0x3c] sm:$0xf]
    %v335 = vld [vmem:[%s6] sm:$0x1]
    %v337 = vlaneseq
    %v338 = vshrl.u32 %v337, 7
    %v339 = vsub.s32 0, %v338
    %v340 = vrot.slane %v335, %v339
    %v358 = vunpack.c.l.b16 %v319
    %v359 = vunpack.c.l.b16 %v320
    %v360 = vunpack.c.l.b16 %v321
    %v361 = vunpack.c.l.b16 %v322
    %v362 = vunpack.c.l.b16 %v323
    %v363 = vunpack.c.l.b16 %v324
    %v364 = vunpack.c.l.b16 %v325
    %v365 = vunpack.c.l.b16 %v326
    %v366 = vunpack.c.l.b16 %v327
    %v367 = vunpack.c.l.b16 %v328
    %v368 = vunpack.c.l.b16 %v329
    %v369 = vunpack.c.l.b16 %v330
    %v370 = vunpack.c.l.b16 %v331
    %v371 = vunpack.c.l.b16 %v332
    %v372 = vunpack.c.l.b16 %v333
    %v373 = vunpack.c.l.b16 %v334
    %v374 = vpack.c.b16 %v359, %v358
    %v375 = vpack.c.b16 %v361, %v360
    %v376 = vpack.c.b16 %v363, %v362
    %v377 = vpack.c.b16 %v365, %v364
    %v378 = vpack.c.b16 %v367, %v366
    %v379 = vpack.c.b16 %v369, %v368
    %v380 = vpack.c.b16 %v371, %v370
    %v381 = vpack.c.b16 %v373, %v372
    %390 = vmatprep.subr.bf16.mxu0 0
    %391 = vmatpush1.bf16.msra.mxu0 %v381
    %392 = vmatprep.subr.bf16.mxu0 0
    %393 = vmatpush1.bf16.msra.mxu0 %v380
    %394 = vmatprep.subr.bf16.mxu0 0
    %395 = vmatpush1.bf16.msra.mxu0 %v379
    %396 = vmatprep.subr.bf16.mxu0 0
    %397 = vmatpush1.bf16.msra.mxu0 %v378
    %398 = vmatprep.subr.bf16.mxu0 0
    %399 = vmatpush1.bf16.msra.mxu0 %v377
    %400 = vmatprep.subr.bf16.mxu0 0
    %401 = vmatpush1.bf16.msra.mxu0 %v376
    %402 = vmatprep.subr.bf16.mxu0 0
    %403 = vmatpush1.bf16.msra.mxu0 %v375
    %404 = vmatprep.subr.bf16.mxu0 0
    %405 = vmatpush1.bf16.msra.mxu0 %v374
    %406 = vmatprep.subr.bf16.mxu0 0
    %407 = vmatpush2.bf16.msra.mxu0 0
    %408 = vmatprep.subr.bf16.mxu0 0
    %409 = vmatpush2.bf16.msra.mxu0 0
    %410 = vmatprep.subr.bf16.mxu0 0
    %411 = vmatpush2.bf16.msra.mxu0 0
    %412 = vmatprep.subr.bf16.mxu0 0
    %413 = vmatpush2.bf16.msra.mxu0 0
    %414 = vmatprep.subr.bf16.mxu0 0
    %415 = vmatpush2.bf16.msra.mxu0 0
    %416 = vmatprep.subr.bf16.mxu0 0
    %417 = vmatpush2.bf16.msra.mxu0 0
    %418 = vmatprep.subr.bf16.mxu0 0
    %419 = vmatpush2.bf16.msra.mxu0 0
    %420 = vmatprep.subr.bf16.mxu0 0
    %421 = vmatpush2.bf16.msra.mxu0 0
    %422 = vmatprep.mubr.bf16.mxu0 0
    %423 = vmatmul.mubr.bf16.gmra.mxu0 %v318
    %v424 = vpop.f32.mrf.mxu0
    %v425 = vadd.f32 %v340, %v424
    %v426 = vpop.f32.mrf.mxu0
    %v427 = vpop.f32.mrf.mxu0
    %v428 = vadd.f32 %v340, %v427
    %v429 = vpop.f32.mrf.mxu0
    %430 = vdwg.mxu0
    %431 = vst [vmem:[#allocation10] sm:$0xff] %v425
    %432 = vst [vmem:[#allocation10 + $0x8] sm:$0xff] %v428
    // Predicated region
    $region46: #{tpu_custom_call.1} parent=1 // pred_check
      _
    $region47: #{tpu_custom_call.1} parent=1 // pred_check_branch
      %434 = sbr.rel (0) target = $region49
    $region48: #{tpu_custom_call.1} parent=1 // pred_region
      %s436 = ssub.s32 256, 256
      %437 = vsyncadd [#allocation4], %s436
      %s438 = sshll.u32 [#allocation10], 4
      %s439 = int_to_ptr.vmem [resolvable:$true] %s438
      %444 = dma.vmem_to_hbm [thread:$0]  %s439, 256, %s7, [#allocation4], 128, 128, 8
    $region49: #{tpu_custom_call.1} parent=1 // pred_fallthru
      _
    // Predicated region
    $region50: #{tpu_custom_call.1} parent=1 // pred_check
      _
    $region51: #{tpu_custom_call.1} parent=1 // pred_check_branch
      %446 = sbr.rel (0) target = $region53
    $region52: #{tpu_custom_call.1} parent=1 // pred_region
      %447 = dma.done [#allocation4], 256
    $region53: #{tpu_custom_call.1} parent=1 // pred_fallthru
      _
    %448 = vsyncpa [#allocation3], 1
    %449 = vsyncpa [#allocation6], 1
    %450 = vsyncpa [#allocation9], 1
    %451 = vsyncpa [#allocation4], 1

</llo_original>
